<compile_context>
chip_gen: v7x
topology: tpu7x:2x2x1
jax: 0.10.0
libtpu: 0.0.40
codegen_flags: <defaults>
</compile_context>

<pallas_src>
import jax
import jax.numpy as jnp
from jax.experimental import pallas as pl
from jax.experimental.pallas import tpu as pltpu

BN_EPS = 1e-5


def _round_up(x, m):
    return (x + m - 1) // m * m


def _tile_candidates(max_tile):
    return tuple(c for c in (2048, 1024, 512, 256, 128) if c <= max_tile)


def _choose_k_tiling(in_num, max_tile):
    """(tk, in_pad, nk). Prefer a single K tile (skips all reduction machinery)."""
    pad128 = _round_up(in_num, 128)
    if pad128 <= max_tile:
        return pad128, pad128, 1
    for tk in _tile_candidates(max_tile):
        in_pad = _round_up(in_num, tk)
        if (in_pad - pad128) * 8 <= pad128:      # keep zero-padding <= 12.5%
            return tk, in_pad, in_pad // tk
    return 128, pad128, pad128 // 128


def _choose_n_tiling(out_num, max_tile):
    """(tn, out_pad, nn). Aim for >=2 N tiles (feeds both v7x TensorCores) with
    tiles as large as possible and lane-dense (multiples of 128)."""
    pad128 = _round_up(out_num, 128)
    if pad128 <= 128:
        return pad128, pad128, 1                 # too narrow to split usefully
    for tn in _tile_candidates(max_tile):
        out_pad = _round_up(out_num, tn)
        nn = out_pad // tn
        if nn >= 2 and (out_pad - pad128) * 4 <= pad128:   # <= 25% extra pad
            return tn, out_pad, nn
    return 128, pad128, pad128 // 128


def _vmem_limit_bytes(B, in_pad, tk, tn, nk):
    footprint = (2 * B * in_pad * 2              # x (bf16, double-buffered)
                 + 2 * tk * tn * 2               # weight tiles (bf16, 2 buffers)
                 + 2 * 2 * tn * 4                # gamma/beta (f32, 2 buffers)
                 + 2 * B * tn * 4                # output (f32, 2 buffers)
                 + (B * tn * 4 if nk > 1 else 0))  # accumulator scratch
    # 2x headroom; floor 16 MiB; cap 48 MiB (v7x physical VMEM is only 64 MiB).
    return int(min(48 * 1024 * 1024, max(2 * footprint, 16 * 1024 * 1024)))


def _bn_prelu_epilogue(y, gb_ref, alpha_ref, o_ref):
    """y: (B, tn) f32 pre-activations. The Linear bias is omitted: it is
    cancelled exactly by training-mode BatchNorm's mean subtraction."""
    inv_b = 1.0 / y.shape[0]
    mean = jnp.sum(y, axis=0, keepdims=True) * inv_b
    centered = y - mean
    var = jnp.sum(centered * centered, axis=0, keepdims=True) * inv_b   # biased
    y_hat = centered * jax.lax.rsqrt(var + BN_EPS)
    gb = gb_ref[...]                              # (2, tn): [gamma; beta]
    y_bn = y_hat * gb[0:1, :] + gb[1:2, :]
    a = alpha_ref[0]                              # PReLU alpha from the scalar path
    o_ref[...] = jnp.where(y_bn >= 0, y_bn, a * y_bn)


def _fc_kernel_single_k(x_ref, wt_ref, gb_ref, alpha_ref, o_ref):
    # in_features fit one K tile: no accumulator, straight into the epilogue.
    y = jnp.dot(x_ref[...], wt_ref[...], preferred_element_type=jnp.float32)
    _bn_prelu_epilogue(y, gb_ref, alpha_ref, o_ref)


def _fc_kernel_multi_k(x_ref, wt_ref, gb_ref, alpha_ref, o_ref, acc_ref):
    k = pl.program_id(1)

    @pl.when(k == 0)
    def _():
        acc_ref[...] = jnp.zeros_like(acc_ref)

    tk = wt_ref.shape[0]
    start = pl.multiple_of(k * tk, tk)
    acc_ref[...] += jnp.dot(x_ref[:, pl.ds(start, tk)], wt_ref[...],
                            preferred_element_type=jnp.float32)

    @pl.when(k == pl.num_programs(1) - 1)
    def _():
        _bn_prelu_epilogue(acc_ref[...], gb_ref, alpha_ref, o_ref)


class FcBlockTPU:
    """Fused Linear -> BatchNorm1d (training-mode batch stats) -> PReLU."""

    def __init__(self, weight, bias, gamma, beta, alpha,
                 max_k_tile=2048, max_n_tile=1024):
        out_num, in_num = weight.shape
        self.in_num, self.out_num = in_num, out_num
        self.tk, self.in_pad, self.nk = _choose_k_tiling(in_num, max_k_tile)
        self.tn, self.out_pad, self.nn = _choose_n_tiling(out_num, max_n_tile)

        # The Linear bias is mathematically cancelled by training-mode BN's
        # mean subtraction, so it is not carried into the kernel at all.
        del bias

        # One-time weight prep (must NOT happen per call: the kernel is
        # weight-streaming bound and this would add an extra HBM pass).
        wt = weight.astype(jnp.float32).T                                # (in, out)
        self.wt_p = jnp.pad(
            wt, ((0, self.in_pad - in_num), (0, self.out_pad - out_num))
        ).astype(jnp.bfloat16)
        gb = jnp.stack([jnp.asarray(gamma, jnp.float32),
                        jnp.asarray(beta, jnp.float32)], axis=0)         # (2, out)
        self.gb_p = jnp.pad(gb, ((0, 0), (0, self.out_pad - out_num)))
        self.alpha = jnp.asarray(alpha, jnp.float32).reshape(1)
        jax.block_until_ready((self.wt_p, self.gb_p, self.alpha))

    def __call__(self, x):
        B = x.shape[0]
        x_p = jnp.pad(x.astype(jnp.float32),
                      ((0, 0), (0, self.in_pad - self.in_num))).astype(jnp.bfloat16)

        cost = pl.CostEstimate(
            flops=2 * B * self.in_pad * self.out_pad,
            transcendentals=self.out_pad,
            bytes_accessed=(x_p.size * 2 + self.wt_p.size * 2
                            + self.gb_p.size * 4 + B * self.out_pad * 4))
        params = pltpu.CompilerParams(
            dimension_semantics=(("parallel",) if self.nk == 1
                                 else ("parallel", "arbitrary")),
            vmem_limit_bytes=_vmem_limit_bytes(B, self.in_pad, self.tk,
                                               self.tn, self.nk))

        if self.nk == 1:
            grid_spec = pltpu.PrefetchScalarGridSpec(
                num_scalar_prefetch=0,
                grid=(self.nn,),
                in_specs=[
                    pl.BlockSpec((B, self.in_pad), lambda n: (0, 0)),        # x (resident)
                    pl.BlockSpec((self.in_pad, self.tn), lambda n: (0, n)),  # weight
                    pl.BlockSpec((2, self.tn), lambda n: (0, n)),            # gamma/beta
                    pl.BlockSpec(memory_space=pltpu.MemorySpace.SMEM),       # alpha
                ],
                out_specs=pl.BlockSpec((B, self.tn), lambda n: (0, n)),
            )
            kernel = _fc_kernel_single_k
        else:
            grid_spec = pltpu.PrefetchScalarGridSpec(
                num_scalar_prefetch=0,
                grid=(self.nn, self.nk),
                in_specs=[
                    pl.BlockSpec((B, self.in_pad), lambda n, k: (0, 0)),     # x (resident)
                    pl.BlockSpec((self.tk, self.tn), lambda n, k: (k, n)),   # weight stream
                    pl.BlockSpec((2, self.tn), lambda n, k: (0, n)),         # gamma/beta
                    pl.BlockSpec(memory_space=pltpu.MemorySpace.SMEM),       # alpha
                ],
                out_specs=pl.BlockSpec((B, self.tn), lambda n, k: (0, n)),
                scratch_shapes=[pltpu.VMEM((B, self.tn), jnp.float32)],
            )
            kernel = _fc_kernel_multi_k

        out = pl.pallas_call(
            kernel,
            out_shape=jax.ShapeDtypeStruct((B, self.out_pad), jnp.float32),
            grid_spec=grid_spec,
            compiler_params=params,
            cost_estimate=cost,
        )(x_p, self.wt_p, self.gb_p, self.alpha)

        return out[:, :self.out_num]


def reference(x, weight, bias, gamma, beta, alpha):
    y = x @ weight.T + bias
    mean = jnp.mean(y, axis=0, keepdims=True)
    var = jnp.mean((y - mean) ** 2, axis=0, keepdims=True)
    y = (y - mean) / jnp.sqrt(var + BN_EPS) * gamma + beta
    return jnp.where(y >= 0, y, alpha * y)


def _run_case(key, B, in_num, out_num, **tile_kwargs):
    kx, kw, kb = jax.random.split(key, 3)
    x = jax.random.normal(kx, (B, in_num), dtype=jnp.float32)

    # PyTorch-like init: Linear uniform(+-1/sqrt(in)); BN gamma=1, beta=0; PReLU a=0.25.
    bound = 1.0 / (in_num ** 0.5)
    weight = jax.random.uniform(kw, (out_num, in_num), jnp.float32, -bound, bound)
    bias = jax.random.uniform(kb, (out_num,), jnp.float32, -bound, bound)
    gamma = jnp.ones((out_num,), jnp.float32)
    beta = jnp.zeros((out_num,), jnp.float32)
    alpha = 0.25

    block = FcBlockTPU(weight, bias, gamma, beta, alpha, **tile_kwargs)
    out = block(x)
    jax.block_until_ready(out)
    assert out.shape == (B, out_num)

    # Tight check against a reference whose Linear operands see the same bf16
    # rounding as the MXU path (isolates kernel-pipeline correctness).
    x_bf = x.astype(jnp.bfloat16).astype(jnp.float32)
    w_bf = weight.astype(jnp.bfloat16).astype(jnp.float32)
    ref_bf = reference(x_bf, w_bf, bias, gamma, beta, alpha)
    err_bf = float(jnp.max(jnp.abs(out - ref_bf)))
    assert jnp.allclose(out, ref_bf, atol=1e-2, rtol=1e-2), err_bf

    # Loose sanity check against exact-f32 semantics.
    ref_f32 = reference(x, weight, bias, gamma, beta, alpha)
    err_f32 = float(jnp.max(jnp.abs(out - ref_f32)))
    assert jnp.allclose(out, ref_f32, atol=2e-1, rtol=2e-1), err_f32
    return out


if __name__ == "__main__":
    key = jax.random.PRNGKey(0)
    k1, k2 = jax.random.split(key)

    # Small demo shape consistent with a DQN FcBlock: batch=8, 32 -> 64 features
    # (single K tile fast path, single N tile).
    _run_case(k1, B=8, in_num=32, out_num=64)

    # Exercise the tiled path (multi-K reduction + >=2 parallel N tiles) at a
    # still-small shape by forcing 128-wide tiles.
    _run_case(k2, B=8, in_num=300, out_num=200, max_k_tile=128, max_n_tile=128)

    print("KERNEL_OK")
</pallas_src>

<mosaic_0001>
module attributes {stable_mosaic.version = 11 : i64} {
  func.func @_fc_kernel_single_k(%arg0: i32, %arg1: memref<8x128xbf16, #tpu.memory_space<vmem>>, %arg2: memref<128x128xbf16, #tpu.memory_space<vmem>>, %arg3: memref<2x128xf32, #tpu.memory_space<vmem>>, %arg4: memref<1xf32, #tpu.memory_space<smem>>, %arg5: memref<8x128xf32, #tpu.memory_space<vmem>>) attributes {dimension_semantics = [#tpu.dimension_semantics<parallel>], iteration_bounds = array<i64: 1>, scalar_prefetch = 0 : i64, scratch_operands = 0 : i64, tpu.core_type = #tpu.core_type<tc>, window_params = [{pipeline_mode = #tpu.pipeline_mode<synchronous>, transform_indices = @transform_0, window_bounds = array<i64: 8, 128>}, {transform_indices = @transform_1, window_bounds = array<i64: 128, 128>}, {transform_indices = @transform_2, window_bounds = array<i64: 2, 128>}, {transform_indices = @transform_3, window_bounds = array<i64: 1>}, {transform_indices = @transform_4, window_bounds = array<i64: 8, 128>}]} {
    %c0 = arith.constant 0 : index
    %c0_0 = arith.constant 0 : index
    %0 = vector.load %arg1[%c0, %c0_0] : memref<8x128xbf16, #tpu.memory_space<vmem>>, vector<8x128xbf16>
    %c0_1 = arith.constant 0 : index
    %c0_2 = arith.constant 0 : index
    %1 = vector.load %arg2[%c0_1, %c0_2] : memref<128x128xbf16, #tpu.memory_space<vmem>>, vector<128x128xbf16>
    %cst = arith.constant dense<0.000000e+00> : vector<8x128xf32>
    %2 = tpu.matmul %0, %1, %cst {dimension_numbers = #tpu.dot_dimension_numbers<[1], [0], [0], [1], [0, 0, 1, 1], [], []>} : vector<8x128xbf16>, vector<128x128xbf16>, vector<8x128xf32> -> vector<8x128xf32>
    %cst_3 = arith.constant dense<0.000000e+00> : vector<128xf32>
    %3 = vector.multi_reduction <add>, %2, %cst_3 [0] : vector<8x128xf32> to vector<128xf32>
    %4 = vector.shape_cast %3 : vector<128xf32> to vector<1x128xf32>
    %cst_4 = arith.constant 1.250000e-01 : f32
    %5 = vector.broadcast %cst_4 : f32 to vector<1x128xf32>
    %6 = arith.mulf %4, %5 : vector<1x128xf32>
    %7 = vector.broadcast %6 : vector<1x128xf32> to vector<8x128xf32>
    %8 = arith.subf %2, %7 : vector<8x128xf32>
    %9 = arith.mulf %8, %8 : vector<8x128xf32>
    %cst_5 = arith.constant dense<0.000000e+00> : vector<128xf32>
    %10 = vector.multi_reduction <add>, %9, %cst_5 [0] : vector<8x128xf32> to vector<128xf32>
    %11 = vector.shape_cast %10 : vector<128xf32> to vector<1x128xf32>
    %cst_6 = arith.constant 1.250000e-01 : f32
    %12 = vector.broadcast %cst_6 : f32 to vector<1x128xf32>
    %13 = arith.mulf %11, %12 : vector<1x128xf32>
    %cst_7 = arith.constant 9.99999974E-6 : f32
    %14 = vector.broadcast %cst_7 : f32 to vector<1x128xf32>
    %15 = arith.addf %13, %14 : vector<1x128xf32>
    %16 = math.rsqrt %15 : vector<1x128xf32>
    %17 = vector.broadcast %16 : vector<1x128xf32> to vector<8x128xf32>
    %18 = arith.mulf %8, %17 : vector<8x128xf32>
    %c0_8 = arith.constant 0 : index
    %c0_9 = arith.constant 0 : index
    %19 = vector.load %arg3[%c0_8, %c0_9] : memref<2x128xf32, #tpu.memory_space<vmem>>, vector<2x128xf32>
    %20 = vector.extract_strided_slice %19 {offsets = [0, 0], sizes = [1, 128], strides = [1, 1]} : vector<2x128xf32> to vector<1x128xf32>
    %21 = vector.broadcast %20 : vector<1x128xf32> to vector<8x128xf32>
    %22 = arith.mulf %18, %21 : vector<8x128xf32>
    %23 = vector.extract_strided_slice %19 {offsets = [1, 0], sizes = [1, 128], strides = [1, 1]} : vector<2x128xf32> to vector<1x128xf32>
    %24 = vector.broadcast %23 : vector<1x128xf32> to vector<8x128xf32>
    %25 = arith.addf %22, %24 : vector<8x128xf32>
    %c0_10 = arith.constant 0 : index
    %26 = memref.load %arg4[%c0_10] : memref<1xf32, #tpu.memory_space<smem>>
    %cst_11 = arith.constant 0.000000e+00 : f32
    %27 = vector.broadcast %cst_11 : f32 to vector<8x128xf32>
    %28 = arith.cmpf oge, %25, %27 : vector<8x128xf32>
    %29 = vector.broadcast %26 : f32 to vector<8x128xf32>
    %30 = arith.mulf %29, %25 : vector<8x128xf32>
    %31 = arith.select %28, %25, %30 : vector<8x128xi1>, vector<8x128xf32>
    %c0_12 = arith.constant 0 : index
    %c0_13 = arith.constant 0 : index
    %32 = vector.load %arg5[%c0_12, %c0_13] : memref<8x128xf32, #tpu.memory_space<vmem>>, vector<8x128xf32>
    tpu.vector_store %arg5[%c0_12, %c0_13], %31 {strides = array<i32>} : memref<8x128xf32, #tpu.memory_space<vmem>>, vector<8x128xf32>,
    return
  }
  func.func @transform_0(%arg0: i32) -> (i32, i32) {
    %c0_i32 = arith.constant 0 : i32
    %c0_i32_0 = arith.constant 0 : i32
    %c0_i32_1 = arith.constant 0 : i32
    return %c0_i32, %c0_i32_0 : i32, i32
  }
  func.func @transform_1(%arg0: i32) -> (i32, i32) {
    %c0_i32 = arith.constant 0 : i32
    %c0_i32_0 = arith.constant 0 : i32
    return %c0_i32, %arg0 : i32, i32
  }
  func.func @transform_2(%arg0: i32) -> (i32, i32) {
    %c0_i32 = arith.constant 0 : i32
    %c0_i32_0 = arith.constant 0 : i32
    return %c0_i32, %arg0 : i32, i32
  }
  func.func @transform_3(%arg0: i32) -> i32 {
    %c0_i32 = arith.constant 0 : i32
    %c0_i32_0 = arith.constant 0 : i32
    return %c0_i32 : i32
  }
  func.func @transform_4(%arg0: i32) -> (i32, i32) {
    %c0_i32 = arith.constant 0 : i32
    %c0_i32_0 = arith.constant 0 : i32
    return %c0_i32, %arg0 : i32, i32
  }
}

</mosaic_0001>

<llo_original>
// kernel: tpu_custom_call.1
$region0: #{tpu_custom_call.1}
  #allocation0 [shape = 'u32[]', space=smem, size = 0x4, offset = 0x4, fixed_abs, tag = 'smem constant byte address 0x4 - core index']
  #allocation1 [shape = 'u32[144,128]{1,0:T(1,128)}', space=vmem, size = 0x12000, scoped, tag = 'internal scratch']
  #allocation2 [shape = 'f32[1]{0:T(128)S(6)}', space=smem, size = 0x200, scoped, tag = 'scoped memory for tpu_custom_call.1']
  %s0 = inlined_call_operand.hbm [shape: bf16[8,128], index: 0, kind: input, shape index: {}]
  %s1 = inlined_call_operand.hbm [shape: bf16[128,128], index: 1, kind: input, shape index: {}]
  %s2 = inlined_call_operand.vmem [shape: f32[2,128], index: 2, kind: input, shape index: {}]
  %s3 = inlined_call_operand.<no memory space> [shape: f32[1], index: 3, kind: input, shape index: {}]
  %s4 = inlined_call_operand.hbm [shape: f32[8,128], index: 4, kind: output, shape index: {}]
  %s5 = sld [smem:[#allocation0]]
  $region34: #{tpu_custom_call.1} parent=0
    _
  %s7 = ssub.s32 1, %s5
  %s8 = scalar_select 0, %s7, %s5
  %9 = sst [smem:[#allocation2]] %s3
  $region1: #{tpu_custom_call.1} parent=0
    #allocation3 [shape = 'u8[2048]{0}', space=vmem, size = 0x800, scoped, tag = 'input window, operand 0, single buffered']
    #allocation4 [shape = 's32[1]{0}', space=sflag, size = 0x4, scoped, tag = 'scoped memory for tpu_custom_call.1']
    #allocation5 [shape = 's32[1]{0}', space=sflag, size = 0x4, scoped, tag = 'scoped memory for tpu_custom_call.1']
    #allocation6 [shape = 'u8[32768]{0}', space=vmem, size = 0x8000, scoped, tag = 'input window, operand 1, single buffered']
    #allocation7 [shape = 's32[1]{0}', space=sflag, size = 0x4, scoped, tag = 'scoped memory for tpu_custom_call.1']
    #allocation8 [shape = 'u8[4096]{0}', space=vmem, size = 0x1000, scoped, tag = 'output window, operand 0, single buffered']
    %10 = vsyncpa [#allocation4], 0
    %11 = vsyncpa [#allocation7], 0
    %12 = vsyncpa [#allocation5], 0
    // Predicated region
    $region2: #{tpu_custom_call.1} parent=1 // pred_check
      _
    $region3: #{tpu_custom_call.1} parent=1 // pred_check_branch
      %14 = sbr.rel (0) target = $region5
    $region4: #{tpu_custom_call.1} parent=1 // pred_region
      %s16 = ssub.s32 64, 64
      %17 = vsyncadd [#allocation4], %s16
      %s19 = sshll.u32 [#allocation3], 4
      %s20 = int_to_ptr.vmem [resolvable:$true] %s19
      %22 = dma.hbm_to_vmem [thread:$0]  %s0, 64, %s20, [#allocation4]
    $region5: #{tpu_custom_call.1} parent=1 // pred_fallthru
      _
    // Predicated region
    $region6: #{tpu_custom_call.1} parent=1 // pred_check
      _
    $region7: #{tpu_custom_call.1} parent=1 // pred_check_branch
      %24 = sbr.rel (0) target = $region9
    $region8: #{tpu_custom_call.1} parent=1 // pred_region
      %s26 = ssub.s32 1024, 1024
      %27 = vsyncadd [#allocation7], %s26
      %s28 = sshll.u32 [#allocation6], 4
      %s29 = int_to_ptr.vmem [resolvable:$true] %s28
      %34 = dma.hbm_to_vmem [thread:$0]  %s1, 1024, %s29, [#allocation7], 64, 64, 4
    $region9: #{tpu_custom_call.1} parent=1 // pred_fallthru
      _
    // Predicated region
    $region10: #{tpu_custom_call.1} parent=1 // pred_check
      _
    $region11: #{tpu_custom_call.1} parent=1 // pred_check_branch
      %36 = sbr.rel (0) target = $region13
    $region12: #{tpu_custom_call.1} parent=1 // pred_region
      _
    $region13: #{tpu_custom_call.1} parent=1 // pred_fallthru
      _
    // Predicated region
    $region14: #{tpu_custom_call.1} parent=1 // pred_check
      _
    $region15: #{tpu_custom_call.1} parent=1 // pred_check_branch
      %38 = sbr.rel (0) target = $region17
    $region16: #{tpu_custom_call.1} parent=1 // pred_region
      _
    $region17: #{tpu_custom_call.1} parent=1 // pred_fallthru
      _
    // Predicated region
    $region18: #{tpu_custom_call.1} parent=1 // pred_check
      _
    $region19: #{tpu_custom_call.1} parent=1 // pred_check_branch
      %40 = sbr.rel (0) target = $region21
    $region20: #{tpu_custom_call.1} parent=1 // pred_region
      %41 = dma.done [#allocation4], 64
    $region21: #{tpu_custom_call.1} parent=1 // pred_fallthru
      _
    // Predicated region
    $region22: #{tpu_custom_call.1} parent=1 // pred_check
      _
    $region23: #{tpu_custom_call.1} parent=1 // pred_check_branch
      %43 = sbr.rel (0) target = $region25
    $region24: #{tpu_custom_call.1} parent=1 // pred_region
      %44 = dma.done [#allocation7], 1024
    $region25: #{tpu_custom_call.1} parent=1 // pred_fallthru
      _
    %v46 = vld [vmem:[#allocation3] sm:$0xf]
    %v47 = vld [vmem:[#allocation6] sm:$0xf]
    %v48 = vld [vmem:[#allocation6 + $0x4] sm:$0xf]
    %v49 = vld [vmem:[#allocation6 + $0x8] sm:$0xf]
    %v50 = vld [vmem:[#allocation6 + $0xc] sm:$0xf]
    %v51 = vld [vmem:[#allocation6 + $0x10] sm:$0xf]
    %v52 = vld [vmem:[#allocation6 + $0x14] sm:$0xf]
    %v53 = vld [vmem:[#allocation6 + $0x18] sm:$0xf]
    %v54 = vld [vmem:[#allocation6 + $0x1c] sm:$0xf]
    %v55 = vld [vmem:[#allocation6 + $0x20] sm:$0xf]
    %v56 = vld [vmem:[#allocation6 + $0x24] sm:$0xf]
    %v57 = vld [vmem:[#allocation6 + $0x28] sm:$0xf]
    %v58 = vld [vmem:[#allocation6 + $0x2c] sm:$0xf]
    %v59 = vld [vmem:[#allocation6 + $0x30] sm:$0xf]
    %v60 = vld [vmem:[#allocation6 + $0x34] sm:$0xf]
    %v61 = vld [vmem:[#allocation6 + $0x38] sm:$0xf]
    %v62 = vld [vmem:[#allocation6 + $0x3c] sm:$0xf]
    %v79 = vunpack.c.l.b16 %v47
    %v80 = vunpack.c.l.b16 %v48
    %v81 = vunpack.c.l.b16 %v49
    %v82 = vunpack.c.l.b16 %v50
    %v83 = vunpack.c.l.b16 %v51
    %v84 = vunpack.c.l.b16 %v52
    %v85 = vunpack.c.l.b16 %v53
    %v86 = vunpack.c.l.b16 %v54
    %v87 = vunpack.c.l.b16 %v55
    %v88 = vunpack.c.l.b16 %v56
    %v89 = vunpack.c.l.b16 %v57
    %v90 = vunpack.c.l.b16 %v58
    %v91 = vunpack.c.l.b16 %v59
    %v92 = vunpack.c.l.b16 %v60
    %v93 = vunpack.c.l.b16 %v61
    %v94 = vunpack.c.l.b16 %v62
    %v95 = vpack.c.b16 %v80, %v79
    %v96 = vpack.c.b16 %v82, %v81
    %v97 = vpack.c.b16 %v84, %v83
    %v98 = vpack.c.b16 %v86, %v85
    %v99 = vpack.c.b16 %v88, %v87
    %v100 = vpack.c.b16 %v90, %v89
    %v101 = vpack.c.b16 %v92, %v91
    %v102 = vpack.c.b16 %v94, %v93
    %111 = vmatprep.subr.bf16.mxu0 0
    %112 = vmatpush1.bf16.msra.mxu0 %v95
    %113 = vmatprep.subr.bf16.mxu0 0
    %114 = vmatpush1.bf16.msra.mxu0 %v96
    %115 = vmatprep.subr.bf16.mxu0 0
    %116 = vmatpush1.bf16.msra.mxu0 %v97
    %117 = vmatprep.subr.bf16.mxu0 0
    %118 = vmatpush1.bf16.msra.mxu0 %v98
    %119 = vmatprep.subr.bf16.mxu0 0
    %120 = vmatpush1.bf16.msra.mxu0 %v99
    %121 = vmatprep.subr.bf16.mxu0 0
    %122 = vmatpush1.bf16.msra.mxu0 %v100
    %123 = vmatprep.subr.bf16.mxu0 0
    %124 = vmatpush1.bf16.msra.mxu0 %v101
    %125 = vmatprep.subr.bf16.mxu0 0
    %126 = vmatpush1.bf16.msra.mxu0 %v102
    %127 = vmatprep.subr.bf16.mxu0 0
    %128 = vmatpush1.bf16.msra.mxu0 0
    %129 = vmatprep.subr.bf16.mxu0 0
    %130 = vmatpush1.bf16.msra.mxu0 0
    %131 = vmatprep.subr.bf16.mxu0 0
    %132 = vmatpush1.bf16.msra.mxu0 0
    %133 = vmatprep.subr.bf16.mxu0 0
    %134 = vmatpush1.bf16.msra.mxu0 0
    %135 = vmatprep.subr.bf16.mxu0 0
    %136 = vmatpush1.bf16.msra.mxu0 0
    %137 = vmatprep.subr.bf16.mxu0 0
    %138 = vmatpush1.bf16.msra.mxu0 0
    %139 = vmatprep.subr.bf16.mxu0 0
    %140 = vmatpush1.bf16.msra.mxu0 0
    %141 = vmatprep.subr.bf16.mxu0 0
    %142 = vmatpush1.bf16.msra.mxu0 0
    %143 = vmatprep.mubr.bf16.mxu0 0
    %144 = vmatmul.mubr.bf16.gmra.mrb[0].mxu0 %v46
    %v145 = vpop.f32.mrb[0].mxu0
    %v146 = vadd.f32 0.0, %v145
    %v147 = vpop.f32.mrb[0].mxu0
    %v148 = vpop.f32.mrb[0].mxu0
    %v149 = vpop.f32.mrb[0].mxu0
    %150 = vdwg.mxu0
    %v151 = vrot.slane %v146, 4
    %v152 = vadd.f32 %v146, %v151
    %v153 = vrot.slane %v152, 2
    %v154 = vadd.f32 %v152, %v153
    %v155 = vrot.slane %v154, 1
    %v156 = vadd.f32 %v154, %v155
    %v157 = vmul.f32 %v156, 0.125
    %v158 = vsub.f32 %v146, %v157
    %v159 = vmul.f32 %v158, %v158
    %v160 = vrot.slane %v159, 4
    %v161 = vadd.f32 %v159, %v160
    %v162 = vrot.slane %v161, 2
    %v163 = vadd.f32 %v161, %v162
    %v164 = vrot.slane %v163, 1
    %v165 = vadd.f32 %v163, %v164
    %v166 = vmul.f32 %v165, 0.125
    %v167 = vadd.f32 %v166, 1e-05
    %v168 = vrsqrt.pop %v167
    %v169 = vmul.f32 %v158, %v168
    %v170 = vld [vmem:[%s2] sm:$0x3]
    %v171 = vlaneseq
    %v172 = vshrl.u32 %v171, 7
    %v173 = vsub.s32 0, %v172
    %v174 = vrot.slane %v170, %v173
    %v175 = vmul.f32 %v169, %v174
    %v176 = vlaneseq
    %v177 = vshrl.u32 %v176, 7
    %v178 = vsub.s32 1, %v177
    %v179 = vrot.slane %v170, %v178
    %v180 = vadd.f32 %v175, %v179
    %s181 = sld [smem:[#allocation2]]
    %vm182 = vcmp.ge.f32.partialorder %v180, 0.0
    %v183 = vstv %s181
    %v184 = vmul.f32 %v183, %v180
    %v185 = vsel %vm182, %v180, %v184
    %186 = vst [vmem:[#allocation8] sm:$0xff] %v185
    // Predicated region
    $region26: #{tpu_custom_call.1} parent=1 // pred_check
      _
    $region27: #{tpu_custom_call.1} parent=1 // pred_check_branch
      %188 = sbr.rel (0) target = $region29
    $region28: #{tpu_custom_call.1} parent=1 // pred_region
      %s190 = ssub.s32 128, 128
      %191 = vsyncadd [#allocation5], %s190
      %s193 = sshll.u32 [#allocation8], 4
      %s194 = int_to_ptr.vmem [resolvable:$true] %s193
      %196 = dma.vmem_to_hbm [thread:$0]  %s194, 128, %s4, [#allocation5]
    $region29: #{tpu_custom_call.1} parent=1 // pred_fallthru
      _
    // Predicated region
    $region30: #{tpu_custom_call.1} parent=1 // pred_check
      _
    $region31: #{tpu_custom_call.1} parent=1 // pred_check_branch
      %198 = sbr.rel (0) target = $region33
    $region32: #{tpu_custom_call.1} parent=1 // pred_region
      %199 = dma.done [#allocation5], 128
    $region33: #{tpu_custom_call.1} parent=1 // pred_fallthru
      _
    %200 = vsyncpa [#allocation4], 1
    %201 = vsyncpa [#allocation7], 1
    %202 = vsyncpa [#allocation5], 1

</llo_original>
